<compile_context>
chip_gen: v7x
topology: tpu7x:2x2x1
jax: 0.10.0
libtpu: 0.0.40
codegen_flags: <defaults>
</compile_context>

<pallas_src>
import functools

import jax
import jax.numpy as jnp
from jax.experimental import pallas as pl
from jax.experimental.pallas import tpu as pltpu


EPSILON = 1e-6

_TILE_BYTE_TARGET = 3 * 1024 * 1024    # ~3 MiB input tile per grid step
_VMEM_TILE_BUDGET = 24 * 1024 * 1024   # 2x in + 2x out buffers + f32 temps
_TM_MAX = 8192
_MIN_GRID_STEPS = 4                    # keep >=4 steps on big inputs (v7x: 2 TCs)


def _round_up(x, mult):
    return ((x + mult - 1) // mult) * mult


def _choose_tm(m, d, itemsize):
    """Row tile: ~3 MiB of input per block (multiple of 8), with the full
    pipelined footprint (double-buffered in+out at input dtype plus ~3 f32
    in-kernel temporaries) kept under a conservative VMEM budget that fits
    v5e/v6e (128 MiB) and v7x (64 MiB/TC)."""
    tm = _TILE_BYTE_TARGET // max(1, d * itemsize)
    per_row_bytes = d * (4 * itemsize + 3 * 4)  # 2x in + 2x out + ~3 f32 temps
    tm = min(tm, _VMEM_TILE_BUDGET // max(1, per_row_bytes))
    # Keep at least _MIN_GRID_STEPS grid steps on big inputs so v7x's two
    # TensorCores both get work; no effect on v5e/v6e (single TC).
    if m >= _MIN_GRID_STEPS * 16:
        tm = min(tm, _round_up(pl.cdiv(m, _MIN_GRID_STEPS), 8))
    tm = max(8, min(_TM_MAX, (tm // 8) * 8))
    tm = min(tm, _round_up(m, 8))
    return tm


def _vmem_limit_bytes(tm, d, itemsize):
    """Scoped-VMEM limit sized from the actual per-step footprint + margin,
    clamped to half the per-generation VMEM capacity."""
    footprint = tm * d * (4 * itemsize + 3 * 4)
    limit = _round_up(footprint, 1 << 20) + (8 << 20)  # compiler-scratch headroom
    try:
        cap = int(pltpu.get_tpu_info().vmem_capacity_bytes)
    except Exception:
        cap = 64 << 20  # assume the most restrictive generation (v7x per-TC)
    return int(min(max(limit, 16 << 20), cap // 2))


def _layernorm_kernel(alpha_ref, gamma_ref, x_ref, o_ref, *, epsilon):
    # x_ref block: (tm, D) in VMEM; alpha/gamma: (1,) scalars in SMEM.
    x = x_ref[...].astype(jnp.float32)
    d = x.shape[-1]

    # Two-pass mean/variance (numerically robust; matches torch behavior).
    mean = jnp.mean(x, axis=-1, keepdims=True)
    diff = x - mean
    # unbiased std (torch.std default): sum(diff^2) / (N - 1)
    var = jnp.sum(diff * diff, axis=-1, keepdims=True) * jnp.float32(1.0 / (d - 1))
    std = jnp.sqrt(var)

    alpha = alpha_ref[0]
    gamma = gamma_ref[0]

    # Per-row reciprocal (tm elements, not tm*d); exact to stay faithful to
    # the torch `x / (std + eps)` form.  Fold alpha into the per-row scale.
    inv = pl.reciprocal(std + jnp.float32(epsilon), approx=False)
    scale = alpha * inv

    o_ref[...] = (diff * scale + gamma).astype(o_ref.dtype)


def pallas_layernorm(x, alpha, gamma, *, epsilon=EPSILON, tm=None):
    """LayerNorm over the last axis of x (any leading shape)."""
    orig_shape = x.shape
    d = orig_shape[-1]
    assert d >= 2, "LayerNorm needs d_model >= 2 (unbiased std divides by d-1)"
    # NOTE: keep d_model a multiple of 128 for lane-dense (unmasked) stores;
    # other sizes stay correct but take the masked vst.msk write path.

    x2 = x.reshape(-1, d)
    m = x2.shape[0]
    itemsize = jnp.dtype(x.dtype).itemsize

    if tm is None:
        tm = _choose_tm(m, d, itemsize)

    # Ragged last block: out-of-range rows read stale/garbage data, but each
    # row is normalized independently and Pallas masks the OOB writeback, so
    # no pad / slice HBM round trip is needed.
    grid = (pl.cdiv(m, tm),)

    kernel = functools.partial(_layernorm_kernel, epsilon=epsilon)

    cost = pl.CostEstimate(
        flops=7 * m * d,
        transcendentals=2 * m,                 # sqrt + reciprocal per row
        bytes_accessed=2 * m * d * itemsize,
    )

    out = pl.pallas_call(
        kernel,
        out_shape=jax.ShapeDtypeStruct((m, d), x.dtype),
        grid=grid,
        in_specs=[
            pl.BlockSpec(memory_space=pltpu.MemorySpace.SMEM),  # alpha (1,)
            pl.BlockSpec(memory_space=pltpu.MemorySpace.SMEM),  # gamma (1,)
            pl.BlockSpec((tm, d), lambda i: (i, 0)),
        ],
        out_specs=pl.BlockSpec((tm, d), lambda i: (i, 0)),
        compiler_params=pltpu.CompilerParams(
            dimension_semantics=("parallel",),
            vmem_limit_bytes=_vmem_limit_bytes(tm, d, itemsize),
        ),
        cost_estimate=cost,
    )(alpha, gamma, x2)

    return out.reshape(orig_shape)


def encoder_forward(x, mask, alpha, gamma, layers=()):
    """Mirrors Encoder.forward: run layer stack, then the Encoder's LayerNorm."""
    # TODO(synk): `layers` (nn.ModuleList) is supplied externally in PyTorch and
    # has no definition in model.py; treated as plain-JAX callables here.  For
    # best performance the final LayerNorm should be fused into the last
    # layer's residual-add epilogue to avoid a full HBM round trip.
    for layer in layers:
        x = layer(x, mask)
    return pallas_layernorm(x, alpha, gamma)


if __name__ == "__main__":
    key = jax.random.PRNGKey(0)
    # Small demo shapes; d_model kept at a multiple of 128 for lane-dense stores.
    batch, seq, d_model = 2, 8, 128

    kx, _ = jax.random.split(key)
    x = jax.random.normal(kx, (batch, seq, d_model), dtype=jnp.float32)
    mask = jnp.ones((batch, 1, seq, seq), dtype=jnp.float32)  # unused (no layers)

    # Deterministic parameter init matching LayerNorm.__init__
    alpha = jnp.ones((1,), dtype=jnp.float32)   # torch.ones(1)
    gamma = jnp.zeros((1,), dtype=jnp.float32)  # torch.zeros(1)

    out = jax.block_until_ready(encoder_forward(x, mask, alpha, gamma, layers=()))

    # Reference check (plain JAX, unbiased std like torch.std default)
    def ref_ln(v):
        mean = jnp.mean(v, axis=-1, keepdims=True)
        std = jnp.sqrt(
            jnp.sum((v - mean) ** 2, axis=-1, keepdims=True) / (v.shape[-1] - 1)
        )
        return alpha[0] * (v - mean) / (std + EPSILON) + gamma[0]

    assert jnp.allclose(out, ref_ln(x), atol=1e-5, rtol=1e-5), "mismatch vs reference"

    # Exercise the ragged-last-block path (rows not a multiple of the tile) —
    # no pad/slice HBM round trip, writes for the pad rows are masked.
    x_odd = jax.random.normal(key, (3, 5, d_model), dtype=jnp.float32)
    out_odd = jax.block_until_ready(pallas_layernorm(x_odd, alpha, gamma))
    assert jnp.allclose(out_odd, ref_ln(x_odd), atol=1e-5, rtol=1e-5), "mismatch (ragged path)"

    print("KERNEL_OK")
</pallas_src>

<mosaic_0001>
module attributes {stable_mosaic.version = 11 : i64} {
  func.func @_layernorm_kernel(%arg0: i32, %arg1: memref<1xf32, #tpu.memory_space<smem>>, %arg2: memref<1xf32, #tpu.memory_space<smem>>, %arg3: memref<16x128xf32, #tpu.memory_space<vmem>>, %arg4: memref<16x128xf32, #tpu.memory_space<vmem>>) attributes {dimension_semantics = [#tpu.dimension_semantics<parallel>], iteration_bounds = array<i64: 1>, scalar_prefetch = 0 : i64, scratch_operands = 0 : i64, tpu.core_type = #tpu.core_type<tc>, window_params = [{transform_indices = @transform_0, window_bounds = array<i64: 1>}, {transform_indices = @transform_1, window_bounds = array<i64: 1>}, {transform_indices = @transform_2, window_bounds = array<i64: 16, 128>}, {transform_indices = @transform_3, window_bounds = array<i64: 16, 128>}]} {
    %c0 = arith.constant 0 : index
    %c0_0 = arith.constant 0 : index
    %0 = vector.load %arg3[%c0, %c0_0] : memref<16x128xf32, #tpu.memory_space<vmem>>, vector<16x128xf32>
    %cst = arith.constant dense<0.000000e+00> : vector<16xf32>
    %1 = vector.multi_reduction <add>, %0, %cst [1] : vector<16x128xf32> to vector<16xf32>
    %2 = vector.shape_cast %1 : vector<16xf32> to vector<16x1xf32>
    %cst_1 = arith.constant 1.280000e+02 : f32
    %3 = vector.broadcast %cst_1 : f32 to vector<16x1xf32>
    %4 = arith.divf %2, %3 : vector<16x1xf32>
    %5 = vector.broadcast %4 : vector<16x1xf32> to vector<16x128xf32>
    %6 = arith.subf %0, %5 : vector<16x128xf32>
    %7 = arith.mulf %6, %6 : vector<16x128xf32>
    %cst_2 = arith.constant dense<0.000000e+00> : vector<16xf32>
    %8 = vector.multi_reduction <add>, %7, %cst_2 [1] : vector<16x128xf32> to vector<16xf32>
    %9 = vector.shape_cast %8 : vector<16xf32> to vector<16x1xf32>
    %cst_3 = arith.constant 0.00787401571 : f32
    %10 = vector.broadcast %cst_3 : f32 to vector<16x1xf32>
    %11 = arith.mulf %9, %10 : vector<16x1xf32>
    %12 = math.sqrt %11 : vector<16x1xf32>
    %c0_4 = arith.constant 0 : index
    %13 = memref.load %arg1[%c0_4] : memref<1xf32, #tpu.memory_space<smem>>
    %c0_5 = arith.constant 0 : index
    %14 = memref.load %arg2[%c0_5] : memref<1xf32, #tpu.memory_space<smem>>
    %cst_6 = arith.constant 9.99999997E-7 : f32
    %15 = vector.broadcast %cst_6 : f32 to vector<16x1xf32>
    %16 = arith.addf %12, %15 : vector<16x1xf32>
    %17 = tpu.reciprocal %16 : vector<16x1xf32> -> vector<16x1xf32>
    %18 = vector.broadcast %13 : f32 to vector<16x1xf32>
    %19 = arith.mulf %18, %17 : vector<16x1xf32>
    %20 = vector.broadcast %19 : vector<16x1xf32> to vector<16x128xf32>
    %21 = arith.mulf %6, %20 : vector<16x128xf32>
    %22 = vector.broadcast %14 : f32 to vector<16x128xf32>
    %23 = arith.addf %21, %22 : vector<16x128xf32>
    %c0_7 = arith.constant 0 : index
    %c0_8 = arith.constant 0 : index
    %24 = vector.load %arg4[%c0_7, %c0_8] : memref<16x128xf32, #tpu.memory_space<vmem>>, vector<16x128xf32>
    tpu.vector_store %arg4[%c0_7, %c0_8], %23 {strides = array<i32>} : memref<16x128xf32, #tpu.memory_space<vmem>>, vector<16x128xf32>,
    return
  }
  func.func @transform_0(%arg0: i32) -> i32 {
    %c0_i32 = arith.constant 0 : i32
    %c0_i32_0 = arith.constant 0 : i32
    return %c0_i32 : i32
  }
  func.func @transform_1(%arg0: i32) -> i32 {
    %c0_i32 = arith.constant 0 : i32
    %c0_i32_0 = arith.constant 0 : i32
    return %c0_i32 : i32
  }
  func.func @transform_2(%arg0: i32) -> (i32, i32) {
    %c0_i32 = arith.constant 0 : i32
    %c0_i32_0 = arith.constant 0 : i32
    return %arg0, %c0_i32 : i32, i32
  }
  func.func @transform_3(%arg0: i32) -> (i32, i32) {
    %c0_i32 = arith.constant 0 : i32
    %c0_i32_0 = arith.constant 0 : i32
    return %arg0, %c0_i32 : i32, i32
  }
}

</mosaic_0001>

<llo_original>
// kernel: tpu_custom_call.1
$region0: #{tpu_custom_call.1}
  #allocation0 [shape = 'u32[]', space=smem, size = 0x4, offset = 0x4, fixed_abs, tag = 'smem constant byte address 0x4 - core index']
  #allocation1 [shape = 'u32[144,128]{1,0:T(1,128)}', space=vmem, size = 0x12000, scoped, tag = 'internal scratch']
  #allocation2 [shape = 'f32[1]{0:T(128)S(6)}', space=smem, size = 0x200, scoped, tag = 'scoped memory for tpu_custom_call.1']
  #allocation3 [shape = 'f32[1]{0:T(128)S(6)}', space=smem, size = 0x200, scoped, tag = 'scoped memory for tpu_custom_call.1']
  %s0 = inlined_call_operand.<no memory space> [shape: f32[1], index: 0, kind: input, shape index: {}]
  %s1 = inlined_call_operand.<no memory space> [shape: f32[1], index: 1, kind: input, shape index: {}]
  %s2 = inlined_call_operand.hbm [shape: f32[16,128], index: 2, kind: input, shape index: {}]
  %s3 = inlined_call_operand.hbm [shape: f32[16,128], index: 3, kind: output, shape index: {}]
  %s4 = sld [smem:[#allocation0]]
  $region26: #{tpu_custom_call.1} parent=0
    _
  %s6 = ssub.s32 1, %s4
  %s7 = scalar_select 0, %s6, %s4
  %8 = sst [smem:[#allocation2]] %s0
  %9 = sst [smem:[#allocation3]] %s1
  $region1: #{tpu_custom_call.1} parent=0
    #allocation4 [shape = 'u8[8192]{0}', space=vmem, size = 0x2000, scoped, tag = 'input window, operand 2, single buffered']
    #allocation5 [shape = 's32[1]{0}', space=sflag, size = 0x4, scoped, tag = 'scoped memory for tpu_custom_call.1']
    #allocation6 [shape = 's32[1]{0}', space=sflag, size = 0x4, scoped, tag = 'scoped memory for tpu_custom_call.1']
    #allocation7 [shape = 'u8[8192]{0}', space=vmem, size = 0x2000, scoped, tag = 'output window, operand 0, single buffered']
    %10 = vsyncpa [#allocation5], 0
    %11 = vsyncpa [#allocation6], 0
    // Predicated region
    $region2: #{tpu_custom_call.1} parent=1 // pred_check
      _
    $region3: #{tpu_custom_call.1} parent=1 // pred_check_branch
      %13 = sbr.rel (0) target = $region5
    $region4: #{tpu_custom_call.1} parent=1 // pred_region
      _
    $region5: #{tpu_custom_call.1} parent=1 // pred_fallthru
      _
    // Predicated region
    $region6: #{tpu_custom_call.1} parent=1 // pred_check
      _
    $region7: #{tpu_custom_call.1} parent=1 // pred_check_branch
      %15 = sbr.rel (0) target = $region9
    $region8: #{tpu_custom_call.1} parent=1 // pred_region
      _
    $region9: #{tpu_custom_call.1} parent=1 // pred_fallthru
      _
    // Predicated region
    $region10: #{tpu_custom_call.1} parent=1 // pred_check
      _
    $region11: #{tpu_custom_call.1} parent=1 // pred_check_branch
      %17 = sbr.rel (0) target = $region13
    $region12: #{tpu_custom_call.1} parent=1 // pred_region
      %s19 = ssub.s32 256, 256
      %20 = vsyncadd [#allocation5], %s19
      %s21 = sshll.u32 [#allocation4], 4
      %s22 = int_to_ptr.vmem [resolvable:$true] %s21
      %27 = dma.hbm_to_vmem [thread:$0]  %s2, 256, %s22, [#allocation5], 128, 128, 8
    $region13: #{tpu_custom_call.1} parent=1 // pred_fallthru
      _
    // Predicated region
    $region14: #{tpu_custom_call.1} parent=1 // pred_check
      _
    $region15: #{tpu_custom_call.1} parent=1 // pred_check_branch
      %29 = sbr.rel (0) target = $region17
    $region16: #{tpu_custom_call.1} parent=1 // pred_region
      %30 = dma.done [#allocation5], 256
    $region17: #{tpu_custom_call.1} parent=1 // pred_fallthru
      _
    %v31 = vld [vmem:[#allocation4] sm:$0xff]
    %v32 = vld [vmem:[#allocation4 + $0x8] sm:$0xff]
    %33 = vadd.xlane.f32.xlu0 %v31
    %v34 = vpop.xlane.xlu0 %33
    %35 = vadd.xlane.f32.xlu0 %v32
    %v36 = vpop.xlane.xlu0 %35
    %v37 = vrcp.pop 128.0
    %v38 = vmul.f32 %v34, %v37
    %v39 = vmul.f32 %v36, %v37
    %v40 = vsub.f32 %v31, %v38
    %v41 = vsub.f32 %v32, %v39
    %v42 = vmul.f32 %v40, %v40
    %v43 = vmul.f32 %v41, %v41
    %44 = vadd.xlane.f32.xlu0 %v42
    %v45 = vpop.xlane.xlu0 %44
    %46 = vadd.xlane.f32.xlu0 %v43
    %v47 = vpop.xlane.xlu0 %46
    %v48 = vmul.f32 %v45, 0.007874016
    %v49 = vmul.f32 %v47, 0.007874016
    %v50 = vrsqrt.pop %v48
    %v51 = vmul.f32 %v48, %v50
    %vm52 = vcmp.eq.f32.partialorder %v48, inf
    %v53 = vsel %vm52, %v48, %v51
    %vm54 = vcmp.eq.f32.partialorder %v48, 0.0
    %v55 = vand.u32 %v48, 2147483648
    %v56 = vsel %vm54, %v55, %v53
    %v57 = vrsqrt.pop %v49
    %v58 = vmul.f32 %v49, %v57
    %vm59 = vcmp.eq.f32.partialorder %v49, inf
    %v60 = vsel %vm59, %v49, %v58
    %vm61 = vcmp.eq.f32.partialorder %v49, 0.0
    %v62 = vand.u32 %v49, 2147483648
    %v63 = vsel %vm61, %v62, %v60
    %s64 = sld [smem:[#allocation2]]
    %s65 = sld [smem:[#allocation3]]
    %v66 = vadd.f32 %v56, 1e-06
    %v67 = vadd.f32 %v63, 1e-06
    %v68 = vrcp.pop %v66
    %v69 = vrcp.pop %v67
    %v70 = vstv %s64
    %v71 = vmul.f32 %v70, %v68
    %v72 = vmul.f32 %v70, %v69
    %v73 = vmul.f32 %v40, %v71
    %v74 = vmul.f32 %v41, %v72
    %v75 = vstv %s65
    %v76 = vadd.f32 %v73, %v75
    %v77 = vadd.f32 %v74, %v75
    %78 = vst [vmem:[#allocation7] sm:$0xff] %v76
    %79 = vst [vmem:[#allocation7 + $0x8] sm:$0xff] %v77
    // Predicated region
    $region18: #{tpu_custom_call.1} parent=1 // pred_check
      _
    $region19: #{tpu_custom_call.1} parent=1 // pred_check_branch
      %81 = sbr.rel (0) target = $region21
    $region20: #{tpu_custom_call.1} parent=1 // pred_region
      %s83 = ssub.s32 256, 256
      %84 = vsyncadd [#allocation6], %s83
      %s85 = sshll.u32 [#allocation7], 4
      %s86 = int_to_ptr.vmem [resolvable:$true] %s85
      %91 = dma.vmem_to_hbm [thread:$0]  %s86, 256, %s3, [#allocation6], 128, 128, 8
    $region21: #{tpu_custom_call.1} parent=1 // pred_fallthru
      _
    // Predicated region
    $region22: #{tpu_custom_call.1} parent=1 // pred_check
      _
    $region23: #{tpu_custom_call.1} parent=1 // pred_check_branch
      %93 = sbr.rel (0) target = $region25
    $region24: #{tpu_custom_call.1} parent=1 // pred_region
      %94 = dma.done [#allocation6], 256
    $region25: #{tpu_custom_call.1} parent=1 // pred_fallthru
      _
    %95 = vsyncpa [#allocation5], 1
    %96 = vsyncpa [#allocation6], 1

</llo_original>
